<compile_context>
chip_gen: v7x
topology: tpu7x:2x2x1
jax: 0.10.0
libtpu: 0.0.40
codegen_flags: <defaults>
</compile_context>

<pallas_src>
import functools

import jax
import jax.numpy as jnp
from jax import lax
from jax.experimental import pallas as pl
from jax.experimental.pallas import tpu as pltpu

EPS_DEFAULT = 1e-5                 # nn.BatchNorm2d default
TARGET_BLOCK_BYTES = 2 * 1024 * 1024   # ~2 MiB blocks: HBM-roofline plateau,
                                       # 4x double-buffered stays < 16 MiB VMEM
VMEM_LIMIT_BYTES = 32 * 1024 * 1024    # safe on v5e/v6e (128 MiB) and v7x (64 MiB)


def _pick_tile(dim, align, max_elems):
    """Largest multiple of `align` that divides `dim` exactly and is <= max_elems.

    If `dim` is not a multiple of `align`, fall back to the full dim (a block
    dim equal to the full array dim is always legal), so no boundary blocks /
    padding are ever needed.
    """
    if dim % align != 0:
        return dim
    best = align
    t = align
    limit = min(dim, max_elems)
    while t <= limit:
        if dim % t == 0:
            best = t
        t += align
    return best


# ---------------------------------------------------------------------------
# Kernel 1: per-(n,c)-row sum / sum-of-squares, split by lane parity
#   x block : (tile_r, tile_s)  rows = (n,c) pairs, lanes = (h,w,part)
#   stat out: (tile_r, 4) f32   [sum_real, sumsq_real, sum_imag, sumsq_imag]
# Grid = (row_tiles ["parallel"], spatial_tiles ["arbitrary" reduction]).
# ---------------------------------------------------------------------------
def _stats_kernel(x_ref, stat_ref):
    x = x_ref[...].astype(jnp.float32)                       # (tr, ts)
    # parity mask only on a (1, ts) row -> broadcast over sublanes (cheap)
    even = (lax.broadcasted_iota(jnp.int32, (1, x.shape[1]), 1) % 2) == 0
    x_even = jnp.where(even, x, 0.0)                          # real part only
    sq = x * x
    sq_even = x_even * x_even                                 # == where(even, sq, 0)

    sum_e = jnp.sum(x_even, axis=1, keepdims=True)            # (tr, 1)
    sum_a = jnp.sum(x, axis=1, keepdims=True)
    ssq_e = jnp.sum(sq_even, axis=1, keepdims=True)
    ssq_a = jnp.sum(sq, axis=1, keepdims=True)

    upd = jnp.concatenate(
        [sum_e, ssq_e, sum_a - sum_e, ssq_a - ssq_e], axis=1)  # (tr, 4)

    @pl.when(pl.program_id(1) == 0)
    def _init():
        stat_ref[...] = upd

    @pl.when(pl.program_id(1) > 0)
    def _accumulate():
        stat_ref[...] = stat_ref[...] + upd


# ---------------------------------------------------------------------------
# Kernel 2: apply folded batch-norm  y = x * scale + shift
#   ss block: (tile_r, 4) f32  [scale_r, shift_r, scale_i, shift_i] per row
#   x block : (tile_r, tile_s)  -> o block same shape, input dtype
# ---------------------------------------------------------------------------
def _apply_kernel(ss_ref, x_ref, o_ref):
    ss = ss_ref[...]                                          # (tr, 4) f32
    x = x_ref[...].astype(jnp.float32)                        # (tr, ts)
    even = (lax.broadcasted_iota(jnp.int32, (1, x.shape[1]), 1) % 2) == 0
    scale = jnp.where(even, ss[:, 0:1], ss[:, 2:3])           # (tr, ts)
    shift = jnp.where(even, ss[:, 1:2], ss[:, 3:4])
    o_ref[...] = (x * scale + shift).astype(o_ref.dtype)


# ---------------------------------------------------------------------------
# Wrapper
# ---------------------------------------------------------------------------
@functools.partial(jax.jit, static_argnames=("eps",))
def cbatchnorm2d_forward(x, gamma_real, beta_real, gamma_imag, beta_imag,
                         *, eps=EPS_DEFAULT):
    """Training-mode CBatchNorm2d forward (batch stats, biased var, affine)."""
    N, C, H, W, two = x.shape
    assert two == 2, "last dim must hold (real, imag)"
    R = N * C                    # rows  = (n, c) pairs          (sublane axis)
    S2 = H * W * 2               # lanes = (h, w, real/imag)     (lane axis)
    db = jnp.dtype(x.dtype).itemsize

    # ---- tile sizing by bytes (lane-dense first, then rows) ---------------
    tile_s = _pick_tile(S2, 128, max(128, TARGET_BLOCK_BYTES // (8 * db)))
    r_cap = max(8, TARGET_BLOCK_BYTES // (tile_s * db))
    if R >= 16:
        r_cap = min(r_cap, R // 2)   # >=2 row tiles -> megacore split on v7x
    tile_r = _pick_tile(R, 8, r_cap)
    num_r = R // tile_r
    num_s = S2 // tile_s

    # Free, layout-preserving view of the native NCHW2 tensor.
    x2 = x.reshape(R, S2)

    # ---- pass 1: per-row sum / sumsq (reduction over the spatial axis) ----
    stats = pl.pallas_call(
        _stats_kernel,
        out_shape=jax.ShapeDtypeStruct((R, 4), jnp.float32),
        grid=(num_r, num_s),
        in_specs=[pl.BlockSpec((tile_r, tile_s), lambda r, c: (r, c))],
        out_specs=pl.BlockSpec((tile_r, 4), lambda r, c: (r, 0)),
        compiler_params=pltpu.CompilerParams(
            dimension_semantics=("parallel", "arbitrary"),
            vmem_limit_bytes=VMEM_LIMIT_BYTES),
    )(x2)

    # ---- fold BN into per-channel scale / shift (tiny math) ---------------
    count = jnp.float32(N * H * W)
    s = stats.reshape(N, C, 4).sum(axis=0)                    # (C, 4) f32
    mean_r = s[:, 0] / count
    var_r = jnp.maximum(s[:, 1] / count - mean_r * mean_r, 0.0)   # biased var
    mean_i = s[:, 2] / count
    var_i = jnp.maximum(s[:, 3] / count - mean_i * mean_i, 0.0)

    scale_r = gamma_real.astype(jnp.float32) * lax.rsqrt(var_r + eps)
    shift_r = beta_real.astype(jnp.float32) - mean_r * scale_r
    scale_i = gamma_imag.astype(jnp.float32) * lax.rsqrt(var_i + eps)
    shift_i = beta_imag.astype(jnp.float32) - mean_i * scale_i

    ss = jnp.stack([scale_r, shift_r, scale_i, shift_i], axis=1)   # (C, 4)
    ss = jnp.tile(ss, (N, 1))                                      # (N*C, 4)

    # ---- pass 2: y = x * scale + shift, streamed in the input dtype -------
    y2 = pl.pallas_call(
        _apply_kernel,
        out_shape=jax.ShapeDtypeStruct((R, S2), x.dtype),
        grid=(num_r, num_s),
        in_specs=[pl.BlockSpec((tile_r, 4), lambda r, c: (r, 0)),
                  pl.BlockSpec((tile_r, tile_s), lambda r, c: (r, c))],
        out_specs=pl.BlockSpec((tile_r, tile_s), lambda r, c: (r, c)),
        compiler_params=pltpu.CompilerParams(
            dimension_semantics=("parallel", "parallel"),
            vmem_limit_bytes=VMEM_LIMIT_BYTES),
    )(ss, x2)

    # Free reshape back to the native layout.
    return y2.reshape(N, C, H, W, 2)


# ---------------------------------------------------------------------------
# Pure-JAX reference (sanity check)
# ---------------------------------------------------------------------------
def _reference_forward(x, gamma_real, beta_real, gamma_imag, beta_imag,
                       eps=EPS_DEFAULT):
    xr = x[..., 0].astype(jnp.float32)
    xi = x[..., 1].astype(jnp.float32)

    def bn(v, g, b):
        m = jnp.mean(v, axis=(0, 2, 3), keepdims=True)
        var = jnp.mean((v - m) ** 2, axis=(0, 2, 3), keepdims=True)
        return (v - m) / jnp.sqrt(var + eps) * g[None, :, None, None] \
               + b[None, :, None, None]

    return jnp.stack([bn(xr, gamma_real, beta_real),
                      bn(xi, gamma_imag, beta_imag)], axis=-1).astype(x.dtype)


if __name__ == "__main__":
    N, C, H, W = 2, 4, 16, 16
    key = jax.random.PRNGKey(0)
    kx, kgr, kbr, kgi, kbi = jax.random.split(key, 5)

    x = jax.random.normal(kx, (N, C, H, W, 2), dtype=jnp.float32)
    gamma_real = jax.random.uniform(kgr, (C,), jnp.float32, 0.5, 1.5)
    beta_real = jax.random.uniform(kbr, (C,), jnp.float32, -0.5, 0.5)
    gamma_imag = jax.random.uniform(kgi, (C,), jnp.float32, 0.5, 1.5)
    beta_imag = jax.random.uniform(kbi, (C,), jnp.float32, -0.5, 0.5)

    out = cbatchnorm2d_forward(x, gamma_real, beta_real, gamma_imag, beta_imag)
    out = jax.block_until_ready(out)

    ref = jax.block_until_ready(
        _reference_forward(x, gamma_real, beta_real, gamma_imag, beta_imag))

    assert out.shape == (N, C, H, W, 2), out.shape
    assert out.dtype == x.dtype, out.dtype
    assert jnp.allclose(out, ref, atol=2e-3, rtol=2e-3), \
        float(jnp.max(jnp.abs(out - ref)))

    print("KERNEL_OK")
</pallas_src>

<mosaic_0001>
module attributes {stable_mosaic.version = 11 : i64} {
  func.func @_stats_kernel(%arg0: i32, %arg1: i32, %arg2: memref<8x512xf32, #tpu.memory_space<vmem>>, %arg3: memref<8x4xf32, #tpu.memory_space<vmem>>) attributes {dimension_semantics = [#tpu.dimension_semantics<parallel>, #tpu.dimension_semantics<arbitrary>], iteration_bounds = array<i64: 1, 1>, scalar_prefetch = 0 : i64, scratch_operands = 0 : i64, tpu.core_type = #tpu.core_type<tc>, window_params = [{transform_indices = @transform_0, window_bounds = array<i64: 8, 512>}, {transform_indices = @transform_1, window_bounds = array<i64: 8, 4>}]} {
    %c0 = arith.constant 0 : index
    %c0_0 = arith.constant 0 : index
    %0 = vector.load %arg2[%c0, %c0_0] : memref<8x512xf32, #tpu.memory_space<vmem>>, vector<8x512xf32>
    %1 = tpu.iota {dimensions = array<i32: 1>} : vector<1x512xi32>
    %c2_i32 = arith.constant 2 : i32
    %c0_i32 = arith.constant 0 : i32
    %2 = arith.cmpi eq, %c2_i32, %c0_i32 : i32
    %c1_i32 = arith.constant 1 : i32
    %3 = arith.select %2, %c1_i32, %c2_i32 : i32
    %4 = vector.broadcast %3 : i32 to vector<1x512xi32>
    %5 = arith.remsi %1, %4 : vector<1x512xi32>
    %c0_i32_1 = arith.constant 0 : i32
    %6 = vector.broadcast %c0_i32_1 : i32 to vector<1x512xi32>
    %7 = arith.cmpi ne, %5, %6 : vector<1x512xi32>
    %c0_i32_2 = arith.constant 0 : i32
    %8 = vector.broadcast %c0_i32_2 : i32 to vector<1x512xi32>
    %9 = arith.cmpi slt, %5, %8 : vector<1x512xi32>
    %c0_i32_3 = arith.constant 0 : i32
    %10 = arith.cmpi slt, %3, %c0_i32_3 : i32
    %11 = vector.broadcast %10 : i1 to vector<1x512xi1>
    %12 = vector.broadcast %11 : vector<1x512xi1> to vector<1x512xi1>
    %13 = arith.xori %9, %12 : vector<1x512xi1>
    %14 = arith.andi %13, %7 : vector<1x512xi1>
    %15 = vector.broadcast %3 : i32 to vector<1x512xi32>
    %16 = arith.addi %5, %15 : vector<1x512xi32>
    %17 = arith.select %14, %16, %5 : vector<1x512xi1>, vector<1x512xi32>
    %c0_i32_4 = arith.constant 0 : i32
    %18 = vector.broadcast %c0_i32_4 : i32 to vector<1x512xi32>
    %19 = arith.cmpi eq, %17, %18 : vector<1x512xi32>
    %cst = arith.constant 0.000000e+00 : f32
    %20 = vector.shape_cast %19 : vector<1x512xi1> to vector<1x512xi1>
    %21 = vector.broadcast %20 : vector<1x512xi1> to vector<8x512xi1>
    %22 = vector.broadcast %cst : f32 to vector<8x512xf32>
    %23 = arith.select %21, %0, %22 : vector<8x512xi1>, vector<8x512xf32>
    %24 = arith.mulf %0, %0 : vector<8x512xf32>
    %25 = arith.mulf %23, %23 : vector<8x512xf32>
    %cst_5 = arith.constant dense<0.000000e+00> : vector<8xf32>
    %26 = vector.multi_reduction <add>, %23, %cst_5 [1] : vector<8x512xf32> to vector<8xf32>
    %27 = vector.shape_cast %26 : vector<8xf32> to vector<8x1xf32>
    %cst_6 = arith.constant dense<0.000000e+00> : vector<8xf32>
    %28 = vector.multi_reduction <add>, %0, %cst_6 [1] : vector<8x512xf32> to vector<8xf32>
    %29 = vector.shape_cast %28 : vector<8xf32> to vector<8x1xf32>
    %cst_7 = arith.constant dense<0.000000e+00> : vector<8xf32>
    %30 = vector.multi_reduction <add>, %25, %cst_7 [1] : vector<8x512xf32> to vector<8xf32>
    %31 = vector.shape_cast %30 : vector<8xf32> to vector<8x1xf32>
    %cst_8 = arith.constant dense<0.000000e+00> : vector<8xf32>
    %32 = vector.multi_reduction <add>, %24, %cst_8 [1] : vector<8x512xf32> to vector<8xf32>
    %33 = vector.shape_cast %32 : vector<8xf32> to vector<8x1xf32>
    %34 = arith.subf %29, %27 : vector<8x1xf32>
    %35 = arith.subf %33, %31 : vector<8x1xf32>
    %36 = tpu.concatenate %27, %31, %34, %35 in 1 : vector<8x1xf32>, vector<8x1xf32>, vector<8x1xf32>, vector<8x1xf32> -> vector<8x4xf32>
    %c0_i32_9 = arith.constant 0 : i32
    %37 = arith.cmpi eq, %arg1, %c0_i32_9 : i32
    %38 = arith.extui %37 : i1 to i32
    %c0_i32_10 = arith.constant 0 : i32
    %39 = arith.cmpi ne, %38, %c0_i32_10 : i32
    scf.if %39 {
      %c0_13 = arith.constant 0 : index
      %c0_14 = arith.constant 0 : index
      %43 = vector.load %arg3[%c0_13, %c0_14] : memref<8x4xf32, #tpu.memory_space<vmem>>, vector<8x4xf32>
      tpu.vector_store %arg3[%c0_13, %c0_14], %36 {strides = array<i32>} : memref<8x4xf32, #tpu.memory_space<vmem>>, vector<8x4xf32>,
    } else {
    }
    %c0_i32_11 = arith.constant 0 : i32
    %40 = arith.cmpi sgt, %arg1, %c0_i32_11 : i32
    %41 = arith.extui %40 : i1 to i32
    %c0_i32_12 = arith.constant 0 : i32
    %42 = arith.cmpi ne, %41, %c0_i32_12 : i32
    scf.if %42 {
      %c0_13 = arith.constant 0 : index
      %c0_14 = arith.constant 0 : index
      %43 = vector.load %arg3[%c0_13, %c0_14] : memref<8x4xf32, #tpu.memory_space<vmem>>, vector<8x4xf32>
      %44 = arith.addf %43, %36 : vector<8x4xf32>
      %c0_15 = arith.constant 0 : index
      %c0_16 = arith.constant 0 : index
      %45 = vector.load %arg3[%c0_15, %c0_16] : memref<8x4xf32, #tpu.memory_space<vmem>>, vector<8x4xf32>
      tpu.vector_store %arg3[%c0_15, %c0_16], %44 {strides = array<i32>} : memref<8x4xf32, #tpu.memory_space<vmem>>, vector<8x4xf32>,
    } else {
    }
    return
  }
  func.func @transform_0(%arg0: i32, %arg1: i32) -> (i32, i32) {
    %c0_i32 = arith.constant 0 : i32
    return %arg0, %arg1 : i32, i32
  }
  func.func @transform_1(%arg0: i32, %arg1: i32) -> (i32, i32) {
    %c0_i32 = arith.constant 0 : i32
    %c0_i32_0 = arith.constant 0 : i32
    return %arg0, %c0_i32 : i32, i32
  }
}

module attributes {stable_mosaic.version = 11 : i64} {
  func.func @_apply_kernel(%arg0: i32, %arg1: i32, %arg2: memref<8x4xf32, #tpu.memory_space<vmem>>, %arg3: memref<8x512xf32, #tpu.memory_space<vmem>>, %arg4: memref<8x512xf32, #tpu.memory_space<vmem>>) attributes {dimension_semantics = [#tpu.dimension_semantics<parallel>, #tpu.dimension_semantics<parallel>], iteration_bounds = array<i64: 1, 1>, scalar_prefetch = 0 : i64, scratch_operands = 0 : i64, tpu.core_type = #tpu.core_type<tc>, window_params = [{transform_indices = @transform_0, window_bounds = array<i64: 8, 4>}, {transform_indices = @transform_1, window_bounds = array<i64: 8, 512>}, {transform_indices = @transform_2, window_bounds = array<i64: 8, 512>}]} {
    %c0 = arith.constant 0 : index
    %c0_0 = arith.constant 0 : index
    %0 = vector.load %arg2[%c0, %c0_0] : memref<8x4xf32, #tpu.memory_space<vmem>>, vector<8x4xf32>
    %c0_1 = arith.constant 0 : index
    %c0_2 = arith.constant 0 : index
    %1 = vector.load %arg3[%c0_1, %c0_2] : memref<8x512xf32, #tpu.memory_space<vmem>>, vector<8x512xf32>
    %2 = tpu.iota {dimensions = array<i32: 1>} : vector<1x512xi32>
    %c2_i32 = arith.constant 2 : i32
    %c0_i32 = arith.constant 0 : i32
    %3 = arith.cmpi eq, %c2_i32, %c0_i32 : i32
    %c1_i32 = arith.constant 1 : i32
    %4 = arith.select %3, %c1_i32, %c2_i32 : i32
    %5 = vector.broadcast %4 : i32 to vector<1x512xi32>
    %6 = arith.remsi %2, %5 : vector<1x512xi32>
    %c0_i32_3 = arith.constant 0 : i32
    %7 = vector.broadcast %c0_i32_3 : i32 to vector<1x512xi32>
    %8 = arith.cmpi ne, %6, %7 : vector<1x512xi32>
    %c0_i32_4 = arith.constant 0 : i32
    %9 = vector.broadcast %c0_i32_4 : i32 to vector<1x512xi32>
    %10 = arith.cmpi slt, %6, %9 : vector<1x512xi32>
    %c0_i32_5 = arith.constant 0 : i32
    %11 = arith.cmpi slt, %4, %c0_i32_5 : i32
    %12 = vector.broadcast %11 : i1 to vector<1x512xi1>
    %13 = vector.broadcast %12 : vector<1x512xi1> to vector<1x512xi1>
    %14 = arith.xori %10, %13 : vector<1x512xi1>
    %15 = arith.andi %14, %8 : vector<1x512xi1>
    %16 = vector.broadcast %4 : i32 to vector<1x512xi32>
    %17 = arith.addi %6, %16 : vector<1x512xi32>
    %18 = arith.select %15, %17, %6 : vector<1x512xi1>, vector<1x512xi32>
    %c0_i32_6 = arith.constant 0 : i32
    %19 = vector.broadcast %c0_i32_6 : i32 to vector<1x512xi32>
    %20 = arith.cmpi eq, %18, %19 : vector<1x512xi32>
    %21 = vector.extract_strided_slice %0 {offsets = [0, 0], sizes = [8, 1], strides = [1, 1]} : vector<8x4xf32> to vector<8x1xf32>
    %22 = vector.extract_strided_slice %0 {offsets = [0, 2], sizes = [8, 1], strides = [1, 1]} : vector<8x4xf32> to vector<8x1xf32>
    %23 = vector.shape_cast %20 : vector<1x512xi1> to vector<1x512xi1>
    %24 = vector.broadcast %23 : vector<1x512xi1> to vector<8x512xi1>
    %25 = vector.shape_cast %21 : vector<8x1xf32> to vector<8x1xf32>
    %26 = vector.broadcast %25 : vector<8x1xf32> to vector<8x512xf32>
    %27 = vector.shape_cast %22 : vector<8x1xf32> to vector<8x1xf32>
    %28 = vector.broadcast %27 : vector<8x1xf32> to vector<8x512xf32>
    %29 = arith.select %24, %26, %28 : vector<8x512xi1>, vector<8x512xf32>
    %30 = vector.extract_strided_slice %0 {offsets = [0, 1], sizes = [8, 1], strides = [1, 1]} : vector<8x4xf32> to vector<8x1xf32>
    %31 = vector.extract_strided_slice %0 {offsets = [0, 3], sizes = [8, 1], strides = [1, 1]} : vector<8x4xf32> to vector<8x1xf32>
    %32 = vector.shape_cast %20 : vector<1x512xi1> to vector<1x512xi1>
    %33 = vector.broadcast %32 : vector<1x512xi1> to vector<8x512xi1>
    %34 = vector.shape_cast %30 : vector<8x1xf32> to vector<8x1xf32>
    %35 = vector.broadcast %34 : vector<8x1xf32> to vector<8x512xf32>
    %36 = vector.shape_cast %31 : vector<8x1xf32> to vector<8x1xf32>
    %37 = vector.broadcast %36 : vector<8x1xf32> to vector<8x512xf32>
    %38 = arith.select %33, %35, %37 : vector<8x512xi1>, vector<8x512xf32>
    %39 = arith.mulf %1, %29 : vector<8x512xf32>
    %40 = arith.addf %39, %38 : vector<8x512xf32>
    %c0_7 = arith.constant 0 : index
    %c0_8 = arith.constant 0 : index
    %41 = vector.load %arg4[%c0_7, %c0_8] : memref<8x512xf32, #tpu.memory_space<vmem>>, vector<8x512xf32>
    tpu.vector_store %arg4[%c0_7, %c0_8], %40 {strides = array<i32>} : memref<8x512xf32, #tpu.memory_space<vmem>>, vector<8x512xf32>,
    return
  }
  func.func @transform_0(%arg0: i32, %arg1: i32) -> (i32, i32) {
    %c0_i32 = arith.constant 0 : i32
    %c0_i32_0 = arith.constant 0 : i32
    return %arg0, %c0_i32 : i32, i32
  }
  func.func @transform_1(%arg0: i32, %arg1: i32) -> (i32, i32) {
    %c0_i32 = arith.constant 0 : i32
    return %arg0, %arg1 : i32, i32
  }
  func.func @transform_2(%arg0: i32, %arg1: i32) -> (i32, i32) {
    %c0_i32 = arith.constant 0 : i32
    return %arg0, %arg1 : i32, i32
  }
}

</mosaic_0001>

<llo_original>
// kernel: cbatchnorm2d_forward.2
$region0: #{cbatchnorm2d_forward.2}
  #allocation0 [shape = 'u32[]', space=smem, size = 0x4, offset = 0x4, fixed_abs, tag = 'smem constant byte address 0x4 - core index']
  #allocation1 [shape = 'u32[144,128]{1,0:T(1,128)}', space=vmem, size = 0x12000, scoped, tag = 'internal scratch']
  %s0 = inlined_call_operand.vmem [shape: f32[8,512], index: 0, kind: input, shape index: {}]
  %s1 = inlined_call_operand.vmem [shape: f32[8,4], index: 1, kind: output, shape index: {}]
  %s2 = sld [smem:[#allocation0]]
  $region22: #{cbatchnorm2d_forward.2} parent=0
    _
  %s4 = ssub.s32 1, %s2
  %s5 = scalar_select 0, %s4, %s2
  // Predicated region
  $region2: #{cbatchnorm2d_forward.2} parent=0 // pred_check
    _
  $region3: #{cbatchnorm2d_forward.2} parent=0 // pred_check_branch
    %7 = sbr.rel (0) target = $region5
  $region4: #{cbatchnorm2d_forward.2} parent=0 // pred_region
    _
  $region5: #{cbatchnorm2d_forward.2} parent=0 // pred_fallthru
    _
  %v8 = vld [vmem:[%s0] sm:$0xff]
  %v9 = vld [vmem:[%s0 + $0x8] sm:$0xff]
  %v10 = vld [vmem:[%s0 + $0x10] sm:$0xff]
  %v11 = vld [vmem:[%s0 + $0x18] sm:$0xff]
  %v12 = vlaneseq
  %v13 = vand.u32 %v12, 127
  %v14 = vadd.s32 %v13, 128
  %v15 = vadd.s32 %v13, 256
  %v16 = vadd.s32 %v13, 384
  %vm17 = vcmp.lt.s32.totalorder %v13, 0
  %v18 = vsub.s32 0, %v13
  %v19 = vsel %vm17, %v18, %v13
  %v20 = vshrl.u32 %v19, 1
  %v21 = vand.u32 %v19, 1
  %v22 = vsub.s32 0, %v21
  %v23 = vsel %vm17, %v22, %v21
  %vm24 = vcmp.lt.s32.totalorder %v14, 0
  %v25 = vsub.s32 0, %v14
  %v26 = vsel %vm24, %v25, %v14
  %v27 = vshrl.u32 %v26, 1
  %v28 = vand.u32 %v26, 1
  %v29 = vsub.s32 0, %v28
  %v30 = vsel %vm24, %v29, %v28
  %vm31 = vcmp.lt.s32.totalorder %v15, 0
  %v32 = vsub.s32 0, %v15
  %v33 = vsel %vm31, %v32, %v15
  %v34 = vshrl.u32 %v33, 1
  %v35 = vand.u32 %v33, 1
  %v36 = vsub.s32 0, %v35
  %v37 = vsel %vm31, %v36, %v35
  %vm38 = vcmp.lt.s32.totalorder %v16, 0
  %v39 = vsub.s32 0, %v16
  %v40 = vsel %vm38, %v39, %v16
  %v41 = vshrl.u32 %v40, 1
  %v42 = vand.u32 %v40, 1
  %v43 = vsub.s32 0, %v42
  %v44 = vsel %vm38, %v43, %v42
  %vm45 = vcmp.ne.s32.totalorder %v23, 0
  %vm46 = vcmp.ne.s32.totalorder %v30, 0
  %vm47 = vcmp.ne.s32.totalorder %v37, 0
  %vm48 = vcmp.ne.s32.totalorder %v44, 0
  %vm49 = vcmp.lt.s32.totalorder %v23, 0
  %vm50 = vcmp.lt.s32.totalorder %v30, 0
  %vm51 = vcmp.lt.s32.totalorder %v37, 0
  %vm52 = vcmp.lt.s32.totalorder %v44, 0
  %vm53 = vmand %vm49, %vm45
  %vm54 = vmand %vm50, %vm46
  %vm55 = vmand %vm51, %vm47
  %vm56 = vmand %vm52, %vm48
  %v57 = vadd.s32 %v23, 2
  %v58 = vadd.s32 %v30, 2
  %v59 = vadd.s32 %v37, 2
  %v60 = vadd.s32 %v44, 2
  %v61 = vsel %vm53, %v57, %v23
  %v62 = vsel %vm54, %v58, %v30
  %v63 = vsel %vm55, %v59, %v37
  %v64 = vsel %vm56, %v60, %v44
  %vm65 = vcmp.eq.s32.totalorder %v61, 0
  %vm66 = vcmp.eq.s32.totalorder %v62, 0
  %vm67 = vcmp.eq.s32.totalorder %v63, 0
  %vm68 = vcmp.eq.s32.totalorder %v64, 0
  %v69 = vsel %vm65, 1, 0
  %v70 = vsel %vm66, 1, 0
  %v71 = vsel %vm67, 1, 0
  %v72 = vsel %vm68, 1, 0
  %vm73 = vcmp.eq.s32.totalorder %v69, 1
  %vm74 = vcmp.eq.s32.totalorder %v70, 1
  %vm75 = vcmp.eq.s32.totalorder %v71, 1
  %vm76 = vcmp.eq.s32.totalorder %v72, 1
  %v77 = vsel %vm73, %v8, 0.0
  %v78 = vsel %vm74, %v9, 0.0
  %v79 = vsel %vm75, %v10, 0.0
  %v80 = vsel %vm76, %v11, 0.0
  %v81 = vmul.f32 %v8, %v8
  %v82 = vmul.f32 %v9, %v9
  %v83 = vmul.f32 %v10, %v10
  %v84 = vmul.f32 %v11, %v11
  %v85 = vmul.f32 %v77, %v77
  %v86 = vmul.f32 %v78, %v78
  %v87 = vmul.f32 %v79, %v79
  %v88 = vmul.f32 %v80, %v80
  %v89 = vadd.f32 %v77, %v78
  %v90 = vadd.f32 %v89, %v79
  %v91 = vadd.f32 %v90, %v80
  %92 = vadd.xlane.f32.xlu0 %v91
  %v93 = vpop.xlane.xlu0 %92
  %v94 = vadd.f32 %v8, %v9
  %v95 = vadd.f32 %v94, %v10
  %v96 = vadd.f32 %v95, %v11
  %97 = vadd.xlane.f32.xlu0 %v96
  %v98 = vpop.xlane.xlu0 %97
  %v99 = vadd.f32 %v85, %v86
  %v100 = vadd.f32 %v99, %v87
  %v101 = vadd.f32 %v100, %v88
  %102 = vadd.xlane.f32.xlu0 %v101
  %v103 = vpop.xlane.xlu0 %102
  %v104 = vadd.f32 %v81, %v82
  %v105 = vadd.f32 %v104, %v83
  %v106 = vadd.f32 %v105, %v84
  %107 = vadd.xlane.f32.xlu0 %v106
  %v108 = vpop.xlane.xlu0 %107
  %v109 = vsub.f32 %v98, %v93
  %v110 = vsub.f32 %v108, %v103
  %vm111 = vcmask 7168
  %v112 = vsel %vm111, %v93, %v103
  %vm113 = vcmask 15360
  %v114 = vsel %vm113, %v112, %v109
  %vm115 = vcmask 23552
  %v116 = vsel %vm115, %v114, %v110
  %p117 = scmp.eq.s32.totalorder 0, 0
  // Predicated region
  $region6: #{cbatchnorm2d_forward.2} parent=0 // pred_check
    %p118 = pneg %p117
  $region7: #{cbatchnorm2d_forward.2} parent=0 // pred_check_branch
    %120 = sbr.rel (%p118) target = $region9
  $region8: #{cbatchnorm2d_forward.2} parent=0 // pred_region
    %vm121 = vcmask 31744
    %122 = vst.msk [vmem:[%s1] sm:$0xff] %vm121, %v116
  $region9: #{cbatchnorm2d_forward.2} parent=0 // pred_fallthru
    _
  %p123 = scmp.gt.s32.totalorder 0, 0
  // Predicated region
  $region10: #{cbatchnorm2d_forward.2} parent=0 // pred_check
    %p124 = pneg %p123
  $region11: #{cbatchnorm2d_forward.2} parent=0 // pred_check_branch
    %126 = sbr.rel (%p124) target = $region13
  $region12: #{cbatchnorm2d_forward.2} parent=0 // pred_region
    %v127 = vld [vmem:[%s1] sm:$0xff]
    %v128 = vadd.f32 %v127, %v116
    %vm129 = vcmask 31744
    %130 = vst.msk [vmem:[%s1] sm:$0xff] %vm129, %v128
  $region13: #{cbatchnorm2d_forward.2} parent=0 // pred_fallthru
    _
  // Predicated region
  $region14: #{cbatchnorm2d_forward.2} parent=0 // pred_check
    _
  $region15: #{cbatchnorm2d_forward.2} parent=0 // pred_check_branch
    %132 = sbr.rel (0) target = $region17
  $region16: #{cbatchnorm2d_forward.2} parent=0 // pred_region
    _
  $region17: #{cbatchnorm2d_forward.2} parent=0 // pred_fallthru
    _
  // Predicated region
  $region18: #{cbatchnorm2d_forward.2} parent=0 // pred_check
    _
  $region19: #{cbatchnorm2d_forward.2} parent=0 // pred_check_branch
    %134 = sbr.rel (0) target = $region21
  $region20: #{cbatchnorm2d_forward.2} parent=0 // pred_region
    _
  $region21: #{cbatchnorm2d_forward.2} parent=0 // pred_fallthru
    _

// kernel: cbatchnorm2d_forward.3
$region0: #{cbatchnorm2d_forward.3}
  #allocation0 [shape = 'u32[]', space=smem, size = 0x4, offset = 0x4, fixed_abs, tag = 'smem constant byte address 0x4 - core index']
  #allocation1 [shape = 'u32[144,128]{1,0:T(1,128)}', space=vmem, size = 0x12000, scoped, tag = 'internal scratch']
  %s0 = inlined_call_operand.vmem [shape: f32[8,4], index: 0, kind: input, shape index: {}]
  %s1 = inlined_call_operand.vmem [shape: f32[8,512], index: 1, kind: input, shape index: {}]
  %s2 = inlined_call_operand.vmem [shape: f32[8,512], index: 2, kind: output, shape index: {}]
  %s3 = sld [smem:[#allocation0]]
  $region18: #{cbatchnorm2d_forward.3} parent=0
    _
  %s5 = ssub.s32 1, %s3
  %s6 = scalar_select 0, %s5, %s3
  // Predicated region
  $region2: #{cbatchnorm2d_forward.3} parent=0 // pred_check
    _
  $region3: #{cbatchnorm2d_forward.3} parent=0 // pred_check_branch
    %8 = sbr.rel (0) target = $region5
  $region4: #{cbatchnorm2d_forward.3} parent=0 // pred_region
    _
  $region5: #{cbatchnorm2d_forward.3} parent=0 // pred_fallthru
    _
  // Predicated region
  $region6: #{cbatchnorm2d_forward.3} parent=0 // pred_check
    _
  $region7: #{cbatchnorm2d_forward.3} parent=0 // pred_check_branch
    %10 = sbr.rel (0) target = $region9
  $region8: #{cbatchnorm2d_forward.3} parent=0 // pred_region
    _
  $region9: #{cbatchnorm2d_forward.3} parent=0 // pred_fallthru
    _
  %v11 = vld [vmem:[%s0] sm:$0xff]
  %v12 = vld [vmem:[%s1] sm:$0xff]
  %v13 = vld [vmem:[%s1 + $0x8] sm:$0xff]
  %v14 = vld [vmem:[%s1 + $0x10] sm:$0xff]
  %v15 = vld [vmem:[%s1 + $0x18] sm:$0xff]
  %v16 = vlaneseq
  %v17 = vand.u32 %v16, 127
  %v18 = vadd.s32 %v17, 128
  %v19 = vadd.s32 %v17, 256
  %v20 = vadd.s32 %v17, 384
  %vm21 = vcmp.lt.s32.totalorder %v17, 0
  %v22 = vsub.s32 0, %v17
  %v23 = vsel %vm21, %v22, %v17
  %v24 = vshrl.u32 %v23, 1
  %v25 = vand.u32 %v23, 1
  %v26 = vsub.s32 0, %v25
  %v27 = vsel %vm21, %v26, %v25
  %vm28 = vcmp.lt.s32.totalorder %v18, 0
  %v29 = vsub.s32 0, %v18
  %v30 = vsel %vm28, %v29, %v18
  %v31 = vshrl.u32 %v30, 1
  %v32 = vand.u32 %v30, 1
  %v33 = vsub.s32 0, %v32
  %v34 = vsel %vm28, %v33, %v32
  %vm35 = vcmp.lt.s32.totalorder %v19, 0
  %v36 = vsub.s32 0, %v19
  %v37 = vsel %vm35, %v36, %v19
  %v38 = vshrl.u32 %v37, 1
  %v39 = vand.u32 %v37, 1
  %v40 = vsub.s32 0, %v39
  %v41 = vsel %vm35, %v40, %v39
  %vm42 = vcmp.lt.s32.totalorder %v20, 0
  %v43 = vsub.s32 0, %v20
  %v44 = vsel %vm42, %v43, %v20
  %v45 = vshrl.u32 %v44, 1
  %v46 = vand.u32 %v44, 1
  %v47 = vsub.s32 0, %v46
  %v48 = vsel %vm42, %v47, %v46
  %vm49 = vcmp.ne.s32.totalorder %v27, 0
  %vm50 = vcmp.ne.s32.totalorder %v34, 0
  %vm51 = vcmp.ne.s32.totalorder %v41, 0
  %vm52 = vcmp.ne.s32.totalorder %v48, 0
  %vm53 = vcmp.lt.s32.totalorder %v27, 0
  %vm54 = vcmp.lt.s32.totalorder %v34, 0
  %vm55 = vcmp.lt.s32.totalorder %v41, 0
  %vm56 = vcmp.lt.s32.totalorder %v48, 0
  %vm57 = vmand %vm53, %vm49
  %vm58 = vmand %vm54, %vm50
  %vm59 = vmand %vm55, %vm51
  %vm60 = vmand %vm56, %vm52
  %v61 = vadd.s32 %v27, 2
  %v62 = vadd.s32 %v34, 2
  %v63 = vadd.s32 %v41, 2
  %v64 = vadd.s32 %v48, 2
  %v65 = vsel %vm57, %v61, %v27
  %v66 = vsel %vm58, %v62, %v34
  %v67 = vsel %vm59, %v63, %v41
  %v68 = vsel %vm60, %v64, %v48
  %vm69 = vcmp.eq.s32.totalorder %v65, 0
  %vm70 = vcmp.eq.s32.totalorder %v66, 0
  %vm71 = vcmp.eq.s32.totalorder %v67, 0
  %vm72 = vcmp.eq.s32.totalorder %v68, 0
  %v73 = vsel %vm69, 1, 0
  %v74 = vsel %vm70, 1, 0
  %v75 = vsel %vm71, 1, 0
  %v76 = vsel %vm72, 1, 0
  %vm77 = vcmp.eq.s32.totalorder %v73, 1
  %vm78 = vcmp.eq.s32.totalorder %v74, 1
  %vm79 = vcmp.eq.s32.totalorder %v75, 1
  %vm80 = vcmp.eq.s32.totalorder %v76, 1
  %82 = vset.pattern.permute.xlu0 0
  %83 = vperm.xlu0 %82, %v11
  %v84 = vpop.permute.xlu0 %83
  %86 = vset.pattern.permute.xlu0 2
  %87 = vperm.xlu0 %86, %v11
  %v88 = vpop.permute.xlu0 %87
  %v90 = vsel %vm77, %v84, %v88
  %v91 = vsel %vm78, %v84, %v88
  %v92 = vsel %vm79, %v84, %v88
  %v93 = vsel %vm80, %v84, %v88
  %94 = vset.pattern.permute.xlu0 1
  %95 = vperm.xlu0 %94, %v11
  %v96 = vpop.permute.xlu0 %95
  %98 = vset.pattern.permute.xlu0 3
  %99 = vperm.xlu0 %98, %v11
  %v100 = vpop.permute.xlu0 %99
  %v102 = vsel %vm77, %v96, %v100
  %v103 = vsel %vm78, %v96, %v100
  %v104 = vsel %vm79, %v96, %v100
  %v105 = vsel %vm80, %v96, %v100
  %v106 = vmul.f32 %v12, %v90
  %v107 = vmul.f32 %v13, %v91
  %v108 = vmul.f32 %v14, %v92
  %v109 = vmul.f32 %v15, %v93
  %v110 = vadd.f32 %v106, %v102
  %v111 = vadd.f32 %v107, %v103
  %v112 = vadd.f32 %v108, %v104
  %v113 = vadd.f32 %v109, %v105
  %114 = vst [vmem:[%s2] sm:$0xff] %v110
  %115 = vst [vmem:[%s2 + $0x8] sm:$0xff] %v111
  %116 = vst [vmem:[%s2 + $0x10] sm:$0xff] %v112
  %117 = vst [vmem:[%s2 + $0x18] sm:$0xff] %v113
  // Predicated region
  $region10: #{cbatchnorm2d_forward.3} parent=0 // pred_check
    _
  $region11: #{cbatchnorm2d_forward.3} parent=0 // pred_check_branch
    %119 = sbr.rel (0) target = $region13
  $region12: #{cbatchnorm2d_forward.3} parent=0 // pred_region
    _
  $region13: #{cbatchnorm2d_forward.3} parent=0 // pred_fallthru
    _
  // Predicated region
  $region14: #{cbatchnorm2d_forward.3} parent=0 // pred_check
    _
  $region15: #{cbatchnorm2d_forward.3} parent=0 // pred_check_branch
    %121 = sbr.rel (0) target = $region17
  $region16: #{cbatchnorm2d_forward.3} parent=0 // pred_region
    _
  $region17: #{cbatchnorm2d_forward.3} parent=0 // pred_fallthru
    _

</llo_original>
